<compile_context>
chip_gen: v5e
topology: v5e:2x2
jax: 0.10.0
libtpu: 0.0.40
codegen_flags: <defaults>
</compile_context>

<pallas_src>
import math
import functools

import jax
import jax.numpy as jnp
from jax import lax
from jax.experimental import pallas as pl
from jax.experimental.pallas import tpu as pltpu

_EPS = 1e-12  # matches torch.nn.functional.normalize default eps


def _round_up(x, m):
    return (x + m - 1) // m * m


def _vmem_cap_bytes():
    """Physical VMEM per TensorCore (64 MiB on v7x, 128 MiB on v5e/v6e)."""
    try:
        return int(pltpu.get_tpu_info().vmem_capacity_bytes)
    except Exception:
        return 64 * 1024 * 1024  # conservative default (v7x-sized)


def _normalize_heads_f32(a, num_head, head_dim):
    """Per-head L2 normalization along the last axis, computed in f32.

    a: [R, H] with H == num_head * head_dim.  Returns f32 [R, H].
    rsqrt(max(sumsq, eps^2)) == 1 / max(||a||, eps), so this matches
    F.normalize exactly (zero rows -> 0, no NaN).
    """
    af = a.astype(jnp.float32)
    if num_head == 1:
        ssq = jnp.sum(af * af, axis=-1, keepdims=True)
        return af * lax.rsqrt(jnp.maximum(ssq, _EPS * _EPS))
    parts = []
    for h in range(num_head):
        sl = af[:, h * head_dim:(h + 1) * head_dim]
        ssq = jnp.sum(sl * sl, axis=-1, keepdims=True)
        parts.append(sl * lax.rsqrt(jnp.maximum(ssq, _EPS * _EPS)))
    # TODO(synk): if head_dim % 128 != 0 these minor-dim slices/concat cost a
    # relayout when used inside the kernel; pad head_dim to a multiple of 128
    # upstream for peak performance.
    return jnp.concatenate(parts, axis=-1)


def _cosine_linear_kernel(xn_ref, w_ref, sigma_ref, o_ref, wn_ref, *,
                          num_head, head_dim):
    # grid = (j: O tiles [parallel, outer], i: batch tiles [arbitrary, inner]).
    i = pl.program_id(1)

    # The weight tile is resident across the inner batch axis: normalize it
    # (per head, f32) once per O-tile, fold sigma in, cache in VMEM scratch.
    @pl.when(i == 0)
    def _():
        wn = _normalize_heads_f32(w_ref[...], num_head, head_dim)
        wn_ref[...] = (sigma_ref[0] * wn).astype(wn_ref.dtype)

    # x arrives pre-normalized from the wrapper.  One K=H MXU contraction over
    # the last dim of both operands (q·kᵀ-style, no materialized transpose),
    # f32 accumulation; epilogue is a pure cast (sigma already folded into wn).
    acc = lax.dot_general(
        xn_ref[...], wn_ref[...],
        dimension_numbers=(((1,), (1,)), ((), ())),
        preferred_element_type=jnp.float32)
    o_ref[...] = acc.astype(o_ref.dtype)


def _choose_tiles(B, H, O_pad, x_itemsize, w_itemsize, out_itemsize, budget):
    """Pick (TM, TN) from an explicit VMEM formula and the chip budget."""
    pack = 8 * max(1, 4 // x_itemsize)  # sublane pack: 8 f32 / 16 bf16 / 32 i8

    def vmem_need(tm, tn):
        return (2 * tm * H * x_itemsize          # x tile, double buffered
                + 2 * tn * H * w_itemsize        # weight tile, double buffered
                + tn * H * w_itemsize            # normalized-weight scratch
                + 2 * tm * tn * out_itemsize)    # output tile, double buffered

    b_pad_min = _round_up(B, pack)
    if b_pad_min * H * x_itemsize <= min(4 << 20, budget // 4):
        tm = b_pad_min                   # x fully resident -> DMA'd exactly once
    else:
        tm = 512 if budget >= (64 << 20) else 256   # bigger tiles on 128 MiB parts
    while tm > pack and vmem_need(tm, 128) > budget:
        tm = max(pack, _round_up(tm // 2, pack))

    tn_opts = [t for t in (512, 256, 128)
               if O_pad % t == 0 and vmem_need(tm, t) <= budget]
    if not tn_opts:
        tn_opts = [128]
    # v7x megacore: prefer the largest TN that still leaves >= 2 O-tiles so the
    # "parallel" O axis can shard across both TensorCores.
    multi = [t for t in tn_opts if O_pad // t >= 2]
    tn = max(multi) if multi else max(tn_opts)
    return tm, tn


def prepare_split_weight(w0, w1, w2):
    """Concat the three branch weights and pad O to a multiple of 128.

    Run ONCE at parameter-update time so the per-forward hot path does no
    weight concat / pad (that would add a full O*H HBM write + re-read in a
    weight-streaming-bound regime).  Returns (padded_weight, valid_out_dim).
    """
    w = jnp.concatenate([w0, w1, w2], axis=0)
    out_dim = w.shape[0]
    o_pad = _round_up(out_dim, 128)
    if o_pad != out_dim:
        w = jnp.pad(w, ((0, o_pad - out_dim), (0, 0)))
    return w, out_dim


def cosine_linear(x, weight_padded, sigma, *, out_dim, num_head=1,
                  block_m=None, block_n=None):
    """SplitCosineLinear forward against a prepared (concat + padded) weight.

    x:             [B, H]
    weight_padded: [O_pad, H], O_pad a multiple of 128 (see prepare_split_weight)
    sigma:         [1] scale, or None
    out_dim:       number of valid output columns (<= O_pad)
    """
    B, H = x.shape
    O_pad, Hw = weight_padded.shape
    assert H == Hw, "hidden dims must match"
    assert H % num_head == 0, "hidden_dim must be divisible by num_head"
    assert O_pad % 128 == 0, "use prepare_split_weight to pad the output dim"
    head_dim = H // num_head

    sigma_arr = (jnp.ones((1,), jnp.float32) if sigma is None
                 else jnp.asarray(sigma, jnp.float32).reshape((1,)))

    x_itemsize = jnp.dtype(x.dtype).itemsize
    w_itemsize = jnp.dtype(weight_padded.dtype).itemsize
    out_itemsize = x_itemsize

    cap = _vmem_cap_bytes()
    budget = max(32 << 20, min(int(cap * 0.6), 96 << 20))

    tm, tn = _choose_tiles(B, H, O_pad, x_itemsize, w_itemsize,
                           out_itemsize, budget)
    if block_m is not None:
        tm = block_m
    if block_n is not None:
        tn = block_n
    assert tm % 8 == 0 and tn % 128 == 0 and O_pad % tn == 0

    need = (2 * tm * H * x_itemsize + 3 * tn * H * w_itemsize
            + 2 * tm * tn * out_itemsize)
    vmem_limit = int(min(int(cap * 0.85),
                         max(32 << 20, need * 13 // 10 + (2 << 20))))
    vmem_limit = max(vmem_limit, need + (1 << 20))

    # Pre-normalize x once (per head, f32) in the wrapper so the kernel never
    # recomputes it per grid step; pad batch rows to the tile size (zero rows
    # stay zero through the matmul and are sliced off).
    xn = _normalize_heads_f32(x, num_head, head_dim).astype(x.dtype)
    b_pad = _round_up(B, tm)
    if b_pad != B:
        xn = jnp.pad(xn, ((0, b_pad - B), (0, 0)))

    grid = (O_pad // tn, b_pad // tm)   # (j: output tiles, i: batch tiles)

    kernel = functools.partial(_cosine_linear_kernel,
                               num_head=num_head, head_dim=head_dim)

    out = pl.pallas_call(
        kernel,
        out_shape=jax.ShapeDtypeStruct((b_pad, O_pad), x.dtype),
        grid=grid,
        in_specs=[
            pl.BlockSpec((tm, H), lambda j, i: (i, 0)),          # x tile
            pl.BlockSpec((tn, H), lambda j, i: (j, 0)),          # weight tile
            pl.BlockSpec(memory_space=pltpu.MemorySpace.SMEM),   # sigma scalar
        ],
        out_specs=pl.BlockSpec((tm, tn), lambda j, i: (i, j)),
        scratch_shapes=[pltpu.VMEM((tn, H), weight_padded.dtype)],  # sigma*Wn cache
        compiler_params=pltpu.CompilerParams(
            dimension_semantics=("parallel", "arbitrary"),
            vmem_limit_bytes=vmem_limit,
        ),
    )(xn, weight_padded, sigma_arr)

    return out[:B, :out_dim]


def split_cosine_linear(x, w0, w1, w2, sigma, num_head=1, **tile_overrides):
    """Convenience one-shot wrapper.  For production, call prepare_split_weight
    once per parameter update and reuse the padded weight across forwards."""
    w_pad, out_dim = prepare_split_weight(w0, w1, w2)
    return cosine_linear(x, w_pad, sigma, out_dim=out_dim, num_head=num_head,
                         **tile_overrides)


# ----------------------------- pure-JAX reference -----------------------------

def _ref_cosine_linear(x, w, num_head):
    hd = x.shape[1] // num_head
    out = 0.0
    for h in range(num_head):
        xs = x[:, h * hd:(h + 1) * hd]
        ws = w[:, h * hd:(h + 1) * hd]
        xn = xs / jnp.maximum(
            jnp.sqrt(jnp.sum(xs * xs, axis=1, keepdims=True)), _EPS)
        wn = ws / jnp.maximum(
            jnp.sqrt(jnp.sum(ws * ws, axis=1, keepdims=True)), _EPS)
        out = out + xn @ wn.T
    return out


def split_cosine_linear_ref(x, w0, w1, w2, sigma, num_head=1):
    outs = [_ref_cosine_linear(x, w, num_head) for w in (w0, w1, w2)]
    out = jnp.concatenate(outs, axis=-1)
    if sigma is not None:
        out = sigma[0] * out
    return out


if __name__ == "__main__":
    # ---- Test 1: module-default small shapes (single grid step) -------------
    hidden_dim, old_out, new_out, batch = 32, 4, 4, 8
    kx, k0, k1, k2 = jax.random.split(jax.random.PRNGKey(0), 4)
    stdv = 1.0 / math.sqrt(hidden_dim)       # CosineLinear.reset_parameters()
    w0 = jax.random.uniform(k0, (1, hidden_dim), jnp.float32, -stdv, stdv)
    w1 = jax.random.uniform(k1, (old_out - 1, hidden_dim), jnp.float32, -stdv, stdv)
    w2 = jax.random.uniform(k2, (new_out, hidden_dim), jnp.float32, -stdv, stdv)
    sigma = jnp.ones((1,), jnp.float32)
    x = jax.random.normal(kx, (batch, hidden_dim), jnp.float32)

    # Intended production usage: prepare the weight once per parameter update,
    # jit the hot path (fuses the x pre-normalization with the pallas_call).
    w_pad, out_dim = prepare_split_weight(w0, w1, w2)
    fwd = jax.jit(cosine_linear,
                  static_argnames=("out_dim", "num_head", "block_m", "block_n"))
    for num_head in (1, 2):
        out = jax.block_until_ready(
            fwd(x, w_pad, sigma, out_dim=out_dim, num_head=num_head))
        ref = split_cosine_linear_ref(x, w0, w1, w2, sigma, num_head=num_head)
        assert out.shape == (batch, old_out + new_out)
        assert jnp.allclose(out, ref, atol=1e-5, rtol=1e-5), \
            f"test1 mismatch vs reference (num_head={num_head})"

    # ---- Test 2: multi-tile coverage: O padding remainder, H % 128 != 0,
    #      non-unit sigma, and (via forced small tiles) multi-batch-tile
    #      scratch reuse across the inner grid axis. ---------------------------
    hidden_dim, old_out, new_out, batch = 96, 100, 100, 40
    kx, k0, k1, k2 = jax.random.split(jax.random.PRNGKey(1), 4)
    stdv = 1.0 / math.sqrt(hidden_dim)
    w0 = jax.random.uniform(k0, (1, hidden_dim), jnp.float32, -stdv, stdv)
    w1 = jax.random.uniform(k1, (old_out - 1, hidden_dim), jnp.float32, -stdv, stdv)
    w2 = jax.random.uniform(k2, (new_out, hidden_dim), jnp.float32, -stdv, stdv)
    sigma2 = jnp.full((1,), 1.7, jnp.float32)
    x = jax.random.normal(kx, (batch, hidden_dim), jnp.float32)

    for num_head, overrides in ((1, {}), (2, {}),
                                (2, dict(block_m=16, block_n=128))):
        out = jax.block_until_ready(
            split_cosine_linear(x, w0, w1, w2, sigma2, num_head=num_head,
                                **overrides))
        ref = split_cosine_linear_ref(x, w0, w1, w2, sigma2, num_head=num_head)
        assert out.shape == (batch, old_out + new_out)
        assert jnp.allclose(out, ref, atol=1e-5, rtol=1e-5), \
            f"test2 mismatch vs reference (num_head={num_head}, {overrides})"

    print("KERNEL_OK")
</pallas_src>

<mosaic_0001>
module attributes {stable_mosaic.version = 11 : i64} {
  func.func @_cosine_linear_kernel(%arg0: i32, %arg1: i32, %arg2: memref<8x32xf32, #tpu.memory_space<vmem>>, %arg3: memref<128x32xf32, #tpu.memory_space<vmem>>, %arg4: memref<1xf32, #tpu.memory_space<smem>>, %arg5: memref<8x128xf32, #tpu.memory_space<vmem>>, %arg6: memref<128x32xf32, #tpu.memory_space<vmem>>) attributes {dimension_semantics = [#tpu.dimension_semantics<parallel>, #tpu.dimension_semantics<arbitrary>], iteration_bounds = array<i64: 1, 1>, scalar_prefetch = 0 : i64, scratch_operands = 1 : i64, tpu.core_type = #tpu.core_type<tc>, window_params = [{transform_indices = @transform_0, window_bounds = array<i64: 8, 32>}, {transform_indices = @transform_1, window_bounds = array<i64: 128, 32>}, {transform_indices = @transform_2, window_bounds = array<i64: 1>}, {transform_indices = @transform_3, window_bounds = array<i64: 8, 128>}]} {
    %c0_i32 = arith.constant 0 : i32
    %0 = arith.cmpi eq, %arg1, %c0_i32 : i32
    %1 = arith.extui %0 : i1 to i32
    %c0_i32_0 = arith.constant 0 : i32
    %2 = arith.cmpi ne, %1, %c0_i32_0 : i32
    scf.if %2 {
      %c0_6 = arith.constant 0 : index
      %c0_7 = arith.constant 0 : index
      %7 = vector.load %arg3[%c0_6, %c0_7] : memref<128x32xf32, #tpu.memory_space<vmem>>, vector<128x32xf32>
      %8 = arith.mulf %7, %7 : vector<128x32xf32>
      %cst_8 = arith.constant dense<0.000000e+00> : vector<128xf32>
      %9 = vector.multi_reduction <add>, %8, %cst_8 [1] : vector<128x32xf32> to vector<128xf32>
      %10 = vector.shape_cast %9 : vector<128xf32> to vector<128x1xf32>
      %cst_9 = arith.constant 1.000000e-24 : f32
      %11 = vector.broadcast %cst_9 : f32 to vector<128x1xf32>
      %12 = arith.maximumf %10, %11 : vector<128x1xf32>
      %13 = math.rsqrt %12 : vector<128x1xf32>
      %14 = vector.broadcast %13 : vector<128x1xf32> to vector<128x32xf32>
      %15 = arith.mulf %7, %14 : vector<128x32xf32>
      %c0_10 = arith.constant 0 : index
      %16 = memref.load %arg4[%c0_10] : memref<1xf32, #tpu.memory_space<smem>>
      %17 = vector.broadcast %16 : f32 to vector<128x32xf32>
      %18 = arith.mulf %17, %15 : vector<128x32xf32>
      %c0_11 = arith.constant 0 : index
      %c0_12 = arith.constant 0 : index
      %19 = vector.load %arg6[%c0_11, %c0_12] : memref<128x32xf32, #tpu.memory_space<vmem>>, vector<128x32xf32>
      tpu.vector_store %arg6[%c0_11, %c0_12], %18 {strides = array<i32>} : memref<128x32xf32, #tpu.memory_space<vmem>>, vector<128x32xf32>,
    } else {
    }
    %c0 = arith.constant 0 : index
    %c0_1 = arith.constant 0 : index
    %3 = vector.load %arg2[%c0, %c0_1] : memref<8x32xf32, #tpu.memory_space<vmem>>, vector<8x32xf32>
    %c0_2 = arith.constant 0 : index
    %c0_3 = arith.constant 0 : index
    %4 = vector.load %arg6[%c0_2, %c0_3] : memref<128x32xf32, #tpu.memory_space<vmem>>, vector<128x32xf32>
    %cst = arith.constant dense<0.000000e+00> : vector<8x128xf32>
    %5 = tpu.matmul %3, %4, %cst {dimension_numbers = #tpu.dot_dimension_numbers<[1], [1], [0], [0], [0, 0, 1, 0], [], []>} : vector<8x32xf32>, vector<128x32xf32>, vector<8x128xf32> -> vector<8x128xf32>
    %c0_4 = arith.constant 0 : index
    %c0_5 = arith.constant 0 : index
    %6 = vector.load %arg5[%c0_4, %c0_5] : memref<8x128xf32, #tpu.memory_space<vmem>>, vector<8x128xf32>
    tpu.vector_store %arg5[%c0_4, %c0_5], %5 {strides = array<i32>} : memref<8x128xf32, #tpu.memory_space<vmem>>, vector<8x128xf32>,
    return
  }
  func.func @transform_0(%arg0: i32, %arg1: i32) -> (i32, i32) {
    %c0_i32 = arith.constant 0 : i32
    %c0_i32_0 = arith.constant 0 : i32
    return %arg1, %c0_i32 : i32, i32
  }
  func.func @transform_1(%arg0: i32, %arg1: i32) -> (i32, i32) {
    %c0_i32 = arith.constant 0 : i32
    %c0_i32_0 = arith.constant 0 : i32
    return %arg0, %c0_i32 : i32, i32
  }
  func.func @transform_2(%arg0: i32, %arg1: i32) -> i32 {
    %c0_i32 = arith.constant 0 : i32
    %c0_i32_0 = arith.constant 0 : i32
    return %c0_i32 : i32
  }
  func.func @transform_3(%arg0: i32, %arg1: i32) -> (i32, i32) {
    %c0_i32 = arith.constant 0 : i32
    return %arg1, %arg0 : i32, i32
  }
}

</mosaic_0001>

<llo_original>
// kernel: cosine_linear.1
$region0: #{cosine_linear.1}
  #allocation0 [shape = 'u32[]', space=smem, size = 0x4, offset = 0x4, fixed_abs, tag = 'smem constant byte address 0x4 - core index']
  #allocation1 [shape = 'u32[72,128]{1,0:T(1,128)}', space=vmem, size = 0x9000, scoped, tag = 'internal scratch']
  #allocation2 [shape = 'f32[128,32]{1,0:T(8,128)}', space=vmem, size = 0x10000, scoped, tag = 'scratch operand']
  #allocation3 [shape = 'f32[1]{0:T(128)S(6)}', space=smem, size = 0x200, scoped, tag = 'scoped memory for cosine_linear.1']
  %s0 = inlined_call_operand.vmem [shape: f32[8,32], index: 0, kind: input, shape index: {}]
  %s1 = inlined_call_operand.vmem [shape: f32[128,32], index: 1, kind: input, shape index: {}]
  %s2 = inlined_call_operand.<no memory space> [shape: f32[1], index: 2, kind: input, shape index: {}]
  %s3 = inlined_call_operand.hbm [shape: f32[8,128], index: 3, kind: output, shape index: {}]
  %s4 = sld [smem:[#allocation0]]
  $region26: #{cosine_linear.1} parent=0
    _
  %s6 = ssub.s32 1, %s4
  %s7 = scalar_select 0, %s6, %s4
  %8 = sst [smem:[#allocation3]] %s2
  $region1: #{cosine_linear.1} parent=0
    #allocation4 [shape = 'u8[4096]{0}', space=vmem, size = 0x1000, scoped, tag = 'output window, operand 0, single buffered']
    #allocation5 [shape = 's32[1]{0}', space=sflag, size = 0x4, scoped, tag = 'scoped memory for cosine_linear.1']
    %9 = vsyncpa [#allocation5], 0
    // Predicated region
    $region2: #{cosine_linear.1} parent=1 // pred_check
      _
    $region3: #{cosine_linear.1} parent=1 // pred_check_branch
      %11 = sbr.rel (0) target = $region5
    $region4: #{cosine_linear.1} parent=1 // pred_region
      _
    $region5: #{cosine_linear.1} parent=1 // pred_fallthru
      _
    // Predicated region
    $region6: #{cosine_linear.1} parent=1 // pred_check
      _
    $region7: #{cosine_linear.1} parent=1 // pred_check_branch
      %13 = sbr.rel (0) target = $region9
    $region8: #{cosine_linear.1} parent=1 // pred_region
      _
    $region9: #{cosine_linear.1} parent=1 // pred_fallthru
      _
    // Predicated region
    $region10: #{cosine_linear.1} parent=1 // pred_check
      _
    $region11: #{cosine_linear.1} parent=1 // pred_check_branch
      %15 = sbr.rel (0) target = $region13
    $region12: #{cosine_linear.1} parent=1 // pred_region
      _
    $region13: #{cosine_linear.1} parent=1 // pred_fallthru
      _
    %p16 = scmp.eq.s32.totalorder 0, 0
    // Predicated region
    $region14: #{cosine_linear.1} parent=1 // pred_check
      %p17 = pneg %p16
    $region15: #{cosine_linear.1} parent=1 // pred_check_branch
      %19 = sbr.rel (%p17) target = $region17
    $region16: #{cosine_linear.1} parent=1 // pred_region
      %v20 = vld [vmem:[%s1] sm:$0xff]
      %v21 = vld [vmem:[%s1 + $0x8] sm:$0xff]
      %v22 = vld [vmem:[%s1 + $0x10] sm:$0xff]
      %v23 = vld [vmem:[%s1 + $0x18] sm:$0xff]
      %v24 = vld [vmem:[%s1 + $0x20] sm:$0xff]
      %v25 = vld [vmem:[%s1 + $0x28] sm:$0xff]
      %v26 = vld [vmem:[%s1 + $0x30] sm:$0xff]
      %v27 = vld [vmem:[%s1 + $0x38] sm:$0xff]
      %v28 = vld [vmem:[%s1 + $0x40] sm:$0xff]
      %v29 = vld [vmem:[%s1 + $0x48] sm:$0xff]
      %v30 = vld [vmem:[%s1 + $0x50] sm:$0xff]
      %v31 = vld [vmem:[%s1 + $0x58] sm:$0xff]
      %v32 = vld [vmem:[%s1 + $0x60] sm:$0xff]
      %v33 = vld [vmem:[%s1 + $0x68] sm:$0xff]
      %v34 = vld [vmem:[%s1 + $0x70] sm:$0xff]
      %v35 = vld [vmem:[%s1 + $0x78] sm:$0xff]
      %v36 = vmul.f32 %v20, %v20
      %v37 = vmul.f32 %v21, %v21
      %v38 = vmul.f32 %v22, %v22
      %v39 = vmul.f32 %v23, %v23
      %v40 = vmul.f32 %v24, %v24
      %v41 = vmul.f32 %v25, %v25
      %v42 = vmul.f32 %v26, %v26
      %v43 = vmul.f32 %v27, %v27
      %v44 = vmul.f32 %v28, %v28
      %v45 = vmul.f32 %v29, %v29
      %v46 = vmul.f32 %v30, %v30
      %v47 = vmul.f32 %v31, %v31
      %v48 = vmul.f32 %v32, %v32
      %v49 = vmul.f32 %v33, %v33
      %v50 = vmul.f32 %v34, %v34
      %v51 = vmul.f32 %v35, %v35
      %vm52 = vcmask 261120
      %v53 = vsel %vm52, %v36, 0.0
      %54 = vadd.xlane.f32.xlu0 %v53
      %v55 = vpop.xlane.xlu0 %54
      %v56 = vsel %vm52, %v37, 0.0
      %57 = vadd.xlane.f32.xlu0 %v56
      %v58 = vpop.xlane.xlu0 %57
      %v59 = vsel %vm52, %v38, 0.0
      %60 = vadd.xlane.f32.xlu0 %v59
      %v61 = vpop.xlane.xlu0 %60
      %v62 = vsel %vm52, %v39, 0.0
      %63 = vadd.xlane.f32.xlu0 %v62
      %v64 = vpop.xlane.xlu0 %63
      %v65 = vsel %vm52, %v40, 0.0
      %66 = vadd.xlane.f32.xlu0 %v65
      %v67 = vpop.xlane.xlu0 %66
      %v68 = vsel %vm52, %v41, 0.0
      %69 = vadd.xlane.f32.xlu0 %v68
      %v70 = vpop.xlane.xlu0 %69
      %v71 = vsel %vm52, %v42, 0.0
      %72 = vadd.xlane.f32.xlu0 %v71
      %v73 = vpop.xlane.xlu0 %72
      %v74 = vsel %vm52, %v43, 0.0
      %75 = vadd.xlane.f32.xlu0 %v74
      %v76 = vpop.xlane.xlu0 %75
      %v77 = vsel %vm52, %v44, 0.0
      %78 = vadd.xlane.f32.xlu0 %v77
      %v79 = vpop.xlane.xlu0 %78
      %v80 = vsel %vm52, %v45, 0.0
      %81 = vadd.xlane.f32.xlu0 %v80
      %v82 = vpop.xlane.xlu0 %81
      %v83 = vsel %vm52, %v46, 0.0
      %84 = vadd.xlane.f32.xlu0 %v83
      %v85 = vpop.xlane.xlu0 %84
      %v86 = vsel %vm52, %v47, 0.0
      %87 = vadd.xlane.f32.xlu0 %v86
      %v88 = vpop.xlane.xlu0 %87
      %v89 = vsel %vm52, %v48, 0.0
      %90 = vadd.xlane.f32.xlu0 %v89
      %v91 = vpop.xlane.xlu0 %90
      %v92 = vsel %vm52, %v49, 0.0
      %93 = vadd.xlane.f32.xlu0 %v92
      %v94 = vpop.xlane.xlu0 %93
      %v95 = vsel %vm52, %v50, 0.0
      %96 = vadd.xlane.f32.xlu0 %v95
      %v97 = vpop.xlane.xlu0 %96
      %v98 = vsel %vm52, %v51, 0.0
      %99 = vadd.xlane.f32.xlu0 %v98
      %v100 = vpop.xlane.xlu0 %99
      %v101 = vmax.f32 %v55, 1e-24
      %v102 = vmax.f32 %v58, 1e-24
      %v103 = vmax.f32 %v61, 1e-24
      %v104 = vmax.f32 %v64, 1e-24
      %v105 = vmax.f32 %v67, 1e-24
      %v106 = vmax.f32 %v70, 1e-24
      %v107 = vmax.f32 %v73, 1e-24
      %v108 = vmax.f32 %v76, 1e-24
      %v109 = vmax.f32 %v79, 1e-24
      %v110 = vmax.f32 %v82, 1e-24
      %v111 = vmax.f32 %v85, 1e-24
      %v112 = vmax.f32 %v88, 1e-24
      %v113 = vmax.f32 %v91, 1e-24
      %v114 = vmax.f32 %v94, 1e-24
      %v115 = vmax.f32 %v97, 1e-24
      %v116 = vmax.f32 %v100, 1e-24
      %v117 = vrsqrt.pop %v101
      %v118 = vmul.f32 %v117, %v101
      %v119 = vmul.f32 %v118, %v117
      %v120 = vmul.f32 0.5, %v119
      %v121 = vsub.f32 1.5, %v120
      %v122 = vmul.f32 %v117, %v121
      %vm123 = vweird.f32 %v101
      %vm124 = vweird.f32 %v117
      %vm125 = vmor %vm123, %vm124
      %v126 = vsel %vm125, %v117, %v122
      %v127 = vrsqrt.pop %v102
      %v128 = vmul.f32 %v127, %v102
      %v129 = vmul.f32 %v128, %v127
      %v130 = vmul.f32 0.5, %v129
      %v131 = vsub.f32 1.5, %v130
      %v132 = vmul.f32 %v127, %v131
      %vm133 = vweird.f32 %v102
      %vm134 = vweird.f32 %v127
      %vm135 = vmor %vm133, %vm134
      %v136 = vsel %vm135, %v127, %v132
      %v137 = vrsqrt.pop %v103
      %v138 = vmul.f32 %v137, %v103
      %v139 = vmul.f32 %v138, %v137
      %v140 = vmul.f32 0.5, %v139
      %v141 = vsub.f32 1.5, %v140
      %v142 = vmul.f32 %v137, %v141
      %vm143 = vweird.f32 %v103
      %vm144 = vweird.f32 %v137
      %vm145 = vmor %vm143, %vm144
      %v146 = vsel %vm145, %v137, %v142
      %v147 = vrsqrt.pop %v104
      %v148 = vmul.f32 %v147, %v104
      %v149 = vmul.f32 %v148, %v147
      %v150 = vmul.f32 0.5, %v149
      %v151 = vsub.f32 1.5, %v150
      %v152 = vmul.f32 %v147, %v151
      %vm153 = vweird.f32 %v104
      %vm154 = vweird.f32 %v147
      %vm155 = vmor %vm153, %vm154
      %v156 = vsel %vm155, %v147, %v152
      %v157 = vrsqrt.pop %v105
      %v158 = vmul.f32 %v157, %v105
      %v159 = vmul.f32 %v158, %v157
      %v160 = vmul.f32 0.5, %v159
      %v161 = vsub.f32 1.5, %v160
      %v162 = vmul.f32 %v157, %v161
      %vm163 = vweird.f32 %v105
      %vm164 = vweird.f32 %v157
      %vm165 = vmor %vm163, %vm164
      %v166 = vsel %vm165, %v157, %v162
      %v167 = vrsqrt.pop %v106
      %v168 = vmul.f32 %v167, %v106
      %v169 = vmul.f32 %v168, %v167
      %v170 = vmul.f32 0.5, %v169
      %v171 = vsub.f32 1.5, %v170
      %v172 = vmul.f32 %v167, %v171
      %vm173 = vweird.f32 %v106
      %vm174 = vweird.f32 %v167
      %vm175 = vmor %vm173, %vm174
      %v176 = vsel %vm175, %v167, %v172
      %v177 = vrsqrt.pop %v107
      %v178 = vmul.f32 %v177, %v107
      %v179 = vmul.f32 %v178, %v177
      %v180 = vmul.f32 0.5, %v179
      %v181 = vsub.f32 1.5, %v180
      %v182 = vmul.f32 %v177, %v181
      %vm183 = vweird.f32 %v107
      %vm184 = vweird.f32 %v177
      %vm185 = vmor %vm183, %vm184
      %v186 = vsel %vm185, %v177, %v182
      %v187 = vrsqrt.pop %v108
      %v188 = vmul.f32 %v187, %v108
      %v189 = vmul.f32 %v188, %v187
      %v190 = vmul.f32 0.5, %v189
      %v191 = vsub.f32 1.5, %v190
      %v192 = vmul.f32 %v187, %v191
      %vm193 = vweird.f32 %v108
      %vm194 = vweird.f32 %v187
      %vm195 = vmor %vm193, %vm194
      %v196 = vsel %vm195, %v187, %v192
      %v197 = vrsqrt.pop %v109
      %v198 = vmul.f32 %v197, %v109
      %v199 = vmul.f32 %v198, %v197
      %v200 = vmul.f32 0.5, %v199
      %v201 = vsub.f32 1.5, %v200
      %v202 = vmul.f32 %v197, %v201
      %vm203 = vweird.f32 %v109
      %vm204 = vweird.f32 %v197
      %vm205 = vmor %vm203, %vm204
      %v206 = vsel %vm205, %v197, %v202
      %v207 = vrsqrt.pop %v110
      %v208 = vmul.f32 %v207, %v110
      %v209 = vmul.f32 %v208, %v207
      %v210 = vmul.f32 0.5, %v209
      %v211 = vsub.f32 1.5, %v210
      %v212 = vmul.f32 %v207, %v211
      %vm213 = vweird.f32 %v110
      %vm214 = vweird.f32 %v207
      %vm215 = vmor %vm213, %vm214
      %v216 = vsel %vm215, %v207, %v212
      %v217 = vrsqrt.pop %v111
      %v218 = vmul.f32 %v217, %v111
      %v219 = vmul.f32 %v218, %v217
      %v220 = vmul.f32 0.5, %v219
      %v221 = vsub.f32 1.5, %v220
      %v222 = vmul.f32 %v217, %v221
      %vm223 = vweird.f32 %v111
      %vm224 = vweird.f32 %v217
      %vm225 = vmor %vm223, %vm224
      %v226 = vsel %vm225, %v217, %v222
      %v227 = vrsqrt.pop %v112
      %v228 = vmul.f32 %v227, %v112
      %v229 = vmul.f32 %v228, %v227
      %v230 = vmul.f32 0.5, %v229
      %v231 = vsub.f32 1.5, %v230
      %v232 = vmul.f32 %v227, %v231
      %vm233 = vweird.f32 %v112
      %vm234 = vweird.f32 %v227
      %vm235 = vmor %vm233, %vm234
      %v236 = vsel %vm235, %v227, %v232
      %v237 = vrsqrt.pop %v113
      %v238 = vmul.f32 %v237, %v113
      %v239 = vmul.f32 %v238, %v237
      %v240 = vmul.f32 0.5, %v239
      %v241 = vsub.f32 1.5, %v240
      %v242 = vmul.f32 %v237, %v241
      %vm243 = vweird.f32 %v113
      %vm244 = vweird.f32 %v237
      %vm245 = vmor %vm243, %vm244
      %v246 = vsel %vm245, %v237, %v242
      %v247 = vrsqrt.pop %v114
      %v248 = vmul.f32 %v247, %v114
      %v249 = vmul.f32 %v248, %v247
      %v250 = vmul.f32 0.5, %v249
      %v251 = vsub.f32 1.5, %v250
      %v252 = vmul.f32 %v247, %v251
      %vm253 = vweird.f32 %v114
      %vm254 = vweird.f32 %v247
      %vm255 = vmor %vm253, %vm254
      %v256 = vsel %vm255, %v247, %v252
      %v257 = vrsqrt.pop %v115
      %v258 = vmul.f32 %v257, %v115
      %v259 = vmul.f32 %v258, %v257
      %v260 = vmul.f32 0.5, %v259
      %v261 = vsub.f32 1.5, %v260
      %v262 = vmul.f32 %v257, %v261
      %vm263 = vweird.f32 %v115
      %vm264 = vweird.f32 %v257
      %vm265 = vmor %vm263, %vm264
      %v266 = vsel %vm265, %v257, %v262
      %v267 = vrsqrt.pop %v116
      %v268 = vmul.f32 %v267, %v116
      %v269 = vmul.f32 %v268, %v267
      %v270 = vmul.f32 0.5, %v269
      %v271 = vsub.f32 1.5, %v270
      %v272 = vmul.f32 %v267, %v271
      %vm273 = vweird.f32 %v116
      %vm274 = vweird.f32 %v267
      %vm275 = vmor %vm273, %vm274
      %v276 = vsel %vm275, %v267, %v272
      %v277 = vmul.f32 %v20, %v126
      %v278 = vmul.f32 %v21, %v136
      %v279 = vmul.f32 %v22, %v146
      %v280 = vmul.f32 %v23, %v156
      %v281 = vmul.f32 %v24, %v166
      %v282 = vmul.f32 %v25, %v176
      %v283 = vmul.f32 %v26, %v186
      %v284 = vmul.f32 %v27, %v196
      %v285 = vmul.f32 %v28, %v206
      %v286 = vmul.f32 %v29, %v216
      %v287 = vmul.f32 %v30, %v226
      %v288 = vmul.f32 %v31, %v236
      %v289 = vmul.f32 %v32, %v246
      %v290 = vmul.f32 %v33, %v256
      %v291 = vmul.f32 %v34, %v266
      %v292 = vmul.f32 %v35, %v276
      %s293 = sld [smem:[#allocation3]]
      %v294 = vstv %s293
      %v295 = vmul.f32 %v294, %v277
      %v296 = vmul.f32 %v294, %v278
      %v297 = vmul.f32 %v294, %v279
      %v298 = vmul.f32 %v294, %v280
      %v299 = vmul.f32 %v294, %v281
      %v300 = vmul.f32 %v294, %v282
      %v301 = vmul.f32 %v294, %v283
      %v302 = vmul.f32 %v294, %v284
      %v303 = vmul.f32 %v294, %v285
      %v304 = vmul.f32 %v294, %v286
      %v305 = vmul.f32 %v294, %v287
      %v306 = vmul.f32 %v294, %v288
      %v307 = vmul.f32 %v294, %v289
      %v308 = vmul.f32 %v294, %v290
      %v309 = vmul.f32 %v294, %v291
      %v310 = vmul.f32 %v294, %v292
      %311 = vst.msk [vmem:[#allocation2] sm:$0xff] %vm52, %v295
      %312 = vst.msk [vmem:[#allocation2 + $0x8] sm:$0xff] %vm52, %v296
      %313 = vst.msk [vmem:[#allocation2 + $0x10] sm:$0xff] %vm52, %v297
      %314 = vst.msk [vmem:[#allocation2 + $0x18] sm:$0xff] %vm52, %v298
      %315 = vst.msk [vmem:[#allocation2 + $0x20] sm:$0xff] %vm52, %v299
      %316 = vst.msk [vmem:[#allocation2 + $0x28] sm:$0xff] %vm52, %v300
      %317 = vst.msk [vmem:[#allocation2 + $0x30] sm:$0xff] %vm52, %v301
      %318 = vst.msk [vmem:[#allocation2 + $0x38] sm:$0xff] %vm52, %v302
      %319 = vst.msk [vmem:[#allocation2 + $0x40] sm:$0xff] %vm52, %v303
      %320 = vst.msk [vmem:[#allocation2 + $0x48] sm:$0xff] %vm52, %v304
      %321 = vst.msk [vmem:[#allocation2 + $0x50] sm:$0xff] %vm52, %v305
      %322 = vst.msk [vmem:[#allocation2 + $0x58] sm:$0xff] %vm52, %v306
      %323 = vst.msk [vmem:[#allocation2 + $0x60] sm:$0xff] %vm52, %v307
      %324 = vst.msk [vmem:[#allocation2 + $0x68] sm:$0xff] %vm52, %v308
      %325 = vst.msk [vmem:[#allocation2 + $0x70] sm:$0xff] %vm52, %v309
      %326 = vst.msk [vmem:[#allocation2 + $0x78] sm:$0xff] %vm52, %v310
    $region17: #{cosine_linear.1} parent=1 // pred_fallthru
      _
    %v327 = vld [vmem:[%s0] sm:$0xff]
    %v328 = vld [vmem:[#allocation2] sm:$0xff]
    %v329 = vld [vmem:[#allocation2 + $0x8] sm:$0xff]
    %v330 = vld [vmem:[#allocation2 + $0x10] sm:$0xff]
    %v331 = vld [vmem:[#allocation2 + $0x18] sm:$0xff]
    %v332 = vld [vmem:[#allocation2 + $0x20] sm:$0xff]
    %v333 = vld [vmem:[#allocation2 + $0x28] sm:$0xff]
    %v334 = vld [vmem:[#allocation2 + $0x30] sm:$0xff]
    %v335 = vld [vmem:[#allocation2 + $0x38] sm:$0xff]
    %v336 = vld [vmem:[#allocation2 + $0x40] sm:$0xff]
    %v337 = vld [vmem:[#allocation2 + $0x48] sm:$0xff]
    %v338 = vld [vmem:[#allocation2 + $0x50] sm:$0xff]
    %v339 = vld [vmem:[#allocation2 + $0x58] sm:$0xff]
    %v340 = vld [vmem:[#allocation2 + $0x60] sm:$0xff]
    %v341 = vld [vmem:[#allocation2 + $0x68] sm:$0xff]
    %v342 = vld [vmem:[#allocation2 + $0x70] sm:$0xff]
    %v343 = vld [vmem:[#allocation2 + $0x78] sm:$0xff]
    %vm344 = vcmask 261120
    %v346 = vsel %vm344, %v327, 0
    %v349 = vsel %vm344, %v328, 0
    %v352 = vsel %vm344, %v329, 0
    %v355 = vsel %vm344, %v330, 0
    %v358 = vsel %vm344, %v331, 0
    %v361 = vsel %vm344, %v332, 0
    %v364 = vsel %vm344, %v333, 0
    %v367 = vsel %vm344, %v334, 0
    %v370 = vsel %vm344, %v335, 0
    %v373 = vsel %vm344, %v336, 0
    %v376 = vsel %vm344, %v337, 0
    %v379 = vsel %vm344, %v338, 0
    %v382 = vsel %vm344, %v339, 0
    %v385 = vsel %vm344, %v340, 0
    %v388 = vsel %vm344, %v341, 0
    %v391 = vsel %vm344, %v342, 0
    %v394 = vsel %vm344, %v343, 0
    %396 = vmatpush.xpose.msra.mxu0 %v394
    %397 = vmatpush.xpose.msra.mxu0 %v391
    %398 = vmatpush.xpose.msra.mxu0 %v388
    %399 = vmatpush.xpose.msra.mxu0 %v385
    %400 = vmatpush.xpose.msra.mxu0 %v382
    %401 = vmatpush.xpose.msra.mxu0 %v379
    %402 = vmatpush.xpose.msra.mxu0 %v376
    %403 = vmatpush.xpose.msra.mxu0 %v373
    %404 = vmatpush.xpose.msra.mxu0 %v370
    %405 = vmatpush.xpose.msra.mxu0 %v367
    %406 = vmatpush.xpose.msra.mxu0 %v364
    %407 = vmatpush.xpose.msra.mxu0 %v361
    %408 = vmatpush.xpose.msra.mxu0 %v358
    %409 = vmatpush.xpose.msra.mxu0 %v355
    %410 = vmatpush.xpose.msra.mxu0 %v352
    %411 = vmatpush.xpose.msra.mxu0 %v349
    %412 = vmatmul.f32.gmra.mxu0 %v346
    %v413 = vpop.f32.mrf.mxu0
    %v414 = vadd.f32 0.0, %v413
    %415 = vdwg.mxu0
    %416 = vst [vmem:[#allocation4] sm:$0xff] %v414
    // Predicated region
    $region18: #{cosine_linear.1} parent=1 // pred_check
      _
    $region19: #{cosine_linear.1} parent=1 // pred_check_branch
      %418 = sbr.rel (0) target = $region21
    $region20: #{cosine_linear.1} parent=1 // pred_region
      %420 = vsyncadd [#allocation5], 0
      %s422 = sshll.u32 [#allocation4], 4
      %s423 = int_to_ptr.vmem [resolvable:$true] %s422
      %s424 = sshll.u32 %s3, 4
      %s425 = int_to_ptr.hbm [resolvable:$true] %s424
      %427 = dma.vmem_to_hbm [thread:$0]  %s423, 128, %s425, [#allocation5]
    $region21: #{cosine_linear.1} parent=1 // pred_fallthru
      _
    // Predicated region
    $region22: #{cosine_linear.1} parent=1 // pred_check
      _
    $region23: #{cosine_linear.1} parent=1 // pred_check_branch
      %429 = sbr.rel (0) target = $region25
    $region24: #{cosine_linear.1} parent=1 // pred_region
      %431 = dma.done [#allocation5], 128
    $region25: #{cosine_linear.1} parent=1 // pred_fallthru
      _
    %432 = vsyncpa [#allocation5], 1

</llo_original>
